<compile_context>
chip_gen: v6e
topology: v6e:2x2x1
jax: 0.10.0
libtpu: 0.0.40
codegen_flags: <defaults>
</compile_context>

<pallas_src>
import numpy as np
import jax
import jax.numpy as jnp
from jax import lax
from jax.experimental import pallas as pl
from jax.experimental.pallas import tpu as pltpu

# ----- NPN nonlinearity constants (standard closed-form approximations) -----
_XI_SQ = float(np.pi / 8.0)
_ALPHA = float(4.0 - 2.0 * np.sqrt(2.0))
_BETA = float(-np.log(np.sqrt(2.0) + 1.0))


def _npn_sigmoid(o_m, o_s):
    # sigmoid(o_m / sqrt(1 + xi^2 * o_s)); rsqrt lowers to the EUP slot.
    a_m = jax.nn.sigmoid(o_m * lax.rsqrt(1.0 + _XI_SQ * o_s))
    t = jax.nn.sigmoid(
        _ALPHA * (o_m + _BETA) * lax.rsqrt(1.0 + _XI_SQ * _ALPHA * _ALPHA * o_s))
    return a_m, t - a_m * a_m


def _npn_tanh(o_m, o_s):
    # tanh(x) = 2*sigmoid(2x) - 1  =>  inner gaussian has mean 2m, var 4s.
    i_m, i_s = _npn_sigmoid(2.0 * o_m, 4.0 * o_s)
    return 2.0 * i_m - 1.0, 4.0 * i_s


def _ew_prod(o1_m, o1_s, o2_m, o2_s):
    # Exactly the reference formula (including its unusual denominators, which
    # can approach zero for adversarial inputs -- faithful to the source).
    # Reciprocals routed to the EUP (separate VLIW slot from the VALU).
    o_m = (o1_s * o2_m + o2_s * o1_m) * pl.reciprocal(o1_m + o1_s, approx=True)
    o_s = o1_s * o2_s * pl.reciprocal(o1_s + o2_s, approx=True)
    return o_m, o_s


# ---------------------------------------------------------------------------
# Kernel: two fused matmuls + elementwise NPN-GRU update.
# ---------------------------------------------------------------------------
def nprn_kernel(lhs_m_ref, lhs_v_ref, w_m_ref, b_m_ref, w_v_ref, b_v_ref,
                out_ref):
    H = lhs_m_ref.shape[-1] // 2

    # Fused MXU matmuls; gate columns are [z | r | s_in | s_h].
    o_m = b_m_ref[...] + jnp.dot(lhs_m_ref[...], w_m_ref[...],
                                 preferred_element_type=jnp.float32)
    o_s = b_v_ref[...] + jnp.dot(lhs_v_ref[...], w_v_ref[...],
                                 preferred_element_type=jnp.float32)

    z_om, r_om = o_m[:, 0:H], o_m[:, H:2 * H]
    ip_om, hp_om = o_m[:, 2 * H:3 * H], o_m[:, 3 * H:4 * H]
    z_os, r_os = o_s[:, 0:H], o_s[:, H:2 * H]
    ip_os, hp_os = o_s[:, 2 * H:3 * H], o_s[:, 3 * H:4 * H]

    # h_m / h_s are recovered from the stacked activation inputs (no extra DMA).
    h_m = lhs_m_ref[:, H:2 * H]
    h_s = lhs_v_ref[:, H:2 * H]

    z_m, z_s = _npn_sigmoid(z_om, z_os)
    r_m, r_s = _npn_sigmoid(r_om, r_os)

    f_m, f_s = _ew_prod(r_m, r_s, hp_om, hp_os)          # r * (h-projection)
    s_m, s_s = _npn_tanh(ip_om + f_m, ip_os + f_s)       # candidate state

    h1_m, h1_s = _ew_prod(z_m, z_s, s_m, s_s)
    h2_m, h2_s = _ew_prod(1.0 - z_m, z_s, h_m, h_s)      # (sic) reuses z_s

    # Single lane-dense output slab: [h_m' | h_s'].
    out_ref[...] = jnp.concatenate([h1_m + h2_m, h1_s + h2_s], axis=-1)


# ---------------------------------------------------------------------------
# Parameter preprocessing (call ONCE; reused across timesteps).
# ---------------------------------------------------------------------------
def fuse_params(p):
    """Block-stacks weights for the two fused matmuls.

      mean:     [x_m | h_m]                 (B,2H) @ w_mean (2H,4H) + b_mean
      variance: [x_s | h_s | x_m^2 | h_m^2] (B,4H) @ w_var  (4H,4H) + b_var

    Gate columns: [z | r | s_in | s_h].  All softplus / W**2 terms are done
    here, not in the kernel.
    """
    sp = jax.nn.softplus                      # log1p-based, overflow-safe
    f32 = lambda a: jnp.asarray(a, jnp.float32)

    Wz_in_m, Wz_h_m = f32(p["Wz_in_m"]), f32(p["Wz_h_m"])
    Wr_in_m, Wr_h_m = f32(p["Wr_in_m"]), f32(p["Wr_h_m"])
    Ws_in_m, Ws_h_m = f32(p["Ws_in_m"]), f32(p["Ws_h_m"])
    Wz_in_s, Wz_h_s = sp(f32(p["Mz_in_s"])), sp(f32(p["Mz_h_s"]))
    Wr_in_s, Wr_h_s = sp(f32(p["Mr_in_s"])), sp(f32(p["Mr_h_s"]))
    Ws_in_s, Ws_h_s = sp(f32(p["Ms_in_s"])), sp(f32(p["Ms_h_s"]))
    bz_m, bz_s = f32(p["bz_m"]), sp(f32(p["pz_s"]))
    br_m, br_s = f32(p["br_m"]), sp(f32(p["pr_s"]))
    bs_in_m, bs_in_s = f32(p["bs_in_m"]), sp(f32(p["ps_in_s"]))
    bs_m, bs_s = f32(p["bs_m"]), sp(f32(p["ps_s"]))

    F, H = Wz_in_m.shape
    assert F == H, ("reference linear_layer uses h_s @ W_in_s -> requires "
                    "input_features == hidden_sz")
    Z = jnp.zeros((H, H), jnp.float32)

    # ----- mean path -----
    w_mean = jnp.concatenate([
        jnp.concatenate([Wz_in_m, Wr_in_m, Ws_in_m, Z], axis=1),        # x_m
        jnp.concatenate([Wz_h_m, Wr_h_m, Z, Ws_h_m], axis=1),           # h_m
    ], axis=0)                                                          # (2H,4H)
    b_mean = jnp.concatenate([bz_m, br_m, bs_in_m, bs_m], axis=1)       # (1,4H)

    # ----- variance path (same-RHS fusion of the reference terms) -----
    #  z/r gate : xs@(W_in_s+W_in_m^2) + hs@(W_in_s+W_h_m^2) + xm^2@W_in_s + hm^2@W_h_s
    #  s_in proj: xs@(Ws_in_s+Ws_in_m^2) + xm^2@Ws_in_s
    #  s_h  proj: hs@(Ws_h_s+Ws_h_m^2)   + hm^2@Ws_h_s
    w_var = jnp.concatenate([
        jnp.concatenate([Wz_in_s + Wz_in_m ** 2, Wr_in_s + Wr_in_m ** 2,
                         Ws_in_s + Ws_in_m ** 2, Z], axis=1),           # x_s
        jnp.concatenate([Wz_in_s + Wz_h_m ** 2, Wr_in_s + Wr_h_m ** 2,
                         Z, Ws_h_s + Ws_h_m ** 2], axis=1),             # h_s
        jnp.concatenate([Wz_in_s, Wr_in_s, Ws_in_s, Z], axis=1),        # x_m^2
        jnp.concatenate([Wz_h_s, Wr_h_s, Z, Ws_h_s], axis=1),           # h_m^2
    ], axis=0)                                                          # (4H,4H)
    b_var = jnp.concatenate([bz_s, br_s, bs_in_s, bs_s], axis=1)        # (1,4H)

    return {"w_mean": w_mean, "b_mean": b_mean,
            "w_var": w_var, "b_var": b_var, "hidden": int(H)}


# ---------------------------------------------------------------------------
# Wrapper: one GRU-NPN step.
# ---------------------------------------------------------------------------
def gaussian_nprn_forward(x_m, h_m, h_s, fused, x_s=None):
    """x_m: (B, F); h_m, h_s: (B, H).  Returns (h_m', h_s')."""
    if x_s is None:
        x_s = jnp.zeros_like(x_m)            # PyTorch path for a plain tensor
    B, F = x_m.shape
    H = fused["hidden"]
    assert F == H and h_m.shape == (B, H) and h_s.shape == (B, H)

    # Lane-dense stacked activations for the two fused matmuls (layout
    # plumbing done wrapper-side).
    lhs_mean = jnp.concatenate([x_m, h_m], axis=1)                       # (B,2H)
    lhs_var = jnp.concatenate([x_s, h_s, x_m * x_m, h_m * h_m], axis=1)  # (B,4H)

    # Batch tiling: "parallel" grid axis (v7x megacore sharding); weights use
    # a constant index_map so they stay VMEM-resident across batch tiles.
    tb = 256 if (B > 256 and B % 256 == 0) else B
    grid = (B // tb,)

    out = pl.pallas_call(
        nprn_kernel,
        out_shape=jax.ShapeDtypeStruct((B, 2 * H), jnp.float32),
        grid=grid,
        in_specs=[
            pl.BlockSpec((tb, 2 * H), lambda i: (i, 0)),        # lhs_mean
            pl.BlockSpec((tb, 4 * H), lambda i: (i, 0)),        # lhs_var
            pl.BlockSpec((2 * H, 4 * H), lambda i: (0, 0)),     # w_mean
            pl.BlockSpec((1, 4 * H), lambda i: (0, 0)),         # b_mean
            pl.BlockSpec((4 * H, 4 * H), lambda i: (0, 0)),     # w_var
            pl.BlockSpec((1, 4 * H), lambda i: (0, 0)),         # b_var
        ],
        out_specs=pl.BlockSpec((tb, 2 * H), lambda i: (i, 0)),
        compiler_params=pltpu.CompilerParams(
            dimension_semantics=("parallel",),
            vmem_limit_bytes=32 * 1024 * 1024,
        ),
    )(lhs_mean, lhs_var, fused["w_mean"], fused["b_mean"],
      fused["w_var"], fused["b_var"])

    # TODO(synk): if this cell is stepped over a sequence, move the time loop
    # into the kernel (grid=(T, B//tb), time axis "arbitrary") so weights stay
    # resident across steps and per-call launch/DMA overhead disappears.
    return out[:, :H], out[:, H:]


# ---------------------------------------------------------------------------
# Deterministic re-implementation of get_init_W / get_init_b.
# ---------------------------------------------------------------------------
def init_params(input_features, hidden_sz, seed=0):
    rng = np.random.RandomState(seed)

    def init_W(_in, _out):
        W_m = 2.0 * np.sqrt(6) / np.sqrt(_in + _out) * (rng.rand(_in, _out) - 0.5)
        W_s = 1.0 * np.sqrt(6) / np.sqrt(_in + _out) * rng.rand(_in, _out)
        M_s = np.log(np.exp(W_s) - 1.0)
        return jnp.asarray(W_m, jnp.float32), jnp.asarray(M_s, jnp.float32)

    def init_b(_out):
        b_m = np.zeros((1, _out))
        p_s = np.exp(-1.0 * np.ones((1, _out)))
        return jnp.asarray(b_m, jnp.float32), jnp.asarray(p_s, jnp.float32)

    p = {}
    p["Wz_in_m"], p["Mz_in_s"] = init_W(input_features, hidden_sz)
    p["Wz_h_m"], p["Mz_h_s"] = init_W(hidden_sz, hidden_sz)
    p["bz_m"], p["pz_s"] = init_b(hidden_sz)
    p["Wr_in_m"], p["Mr_in_s"] = init_W(input_features, hidden_sz)
    p["Wr_h_m"], p["Mr_h_s"] = init_W(hidden_sz, hidden_sz)
    p["br_m"], p["pr_s"] = init_b(hidden_sz)
    p["Ws_in_m"], p["Ms_in_s"] = init_W(input_features, hidden_sz)
    p["Ws_h_m"], p["Ms_h_s"] = init_W(hidden_sz, hidden_sz)
    p["bs_in_m"], p["ps_in_s"] = init_b(hidden_sz)
    p["bs_m"], p["ps_s"] = init_b(hidden_sz)
    return p


if __name__ == "__main__":
    # NOTE: input_features must equal hidden_sz for the original module's
    # linear_layer (it uses h_s @ W_in_s) to be shape-consistent.
    batch = 8
    input_features = 32
    hidden_sz = 32

    params = init_params(input_features, hidden_sz, seed=0)
    fused = fuse_params(params)          # parameter-only transforms, done once

    key = jax.random.PRNGKey(0)
    k1, k2, k3 = jax.random.split(key, 3)
    x = jax.random.normal(k1, (batch, input_features), dtype=jnp.float32)
    h_m = jax.random.normal(k2, (batch, hidden_sz), dtype=jnp.float32)
    h_s = jax.random.uniform(k3, (batch, hidden_sz), dtype=jnp.float32,
                             minval=0.1, maxval=1.0)   # variances > 0

    h_m_new, h_s_new = gaussian_nprn_forward(x, h_m, h_s, fused)
    jax.block_until_ready((h_m_new, h_s_new))

    assert h_m_new.shape == (batch, hidden_sz)
    assert h_s_new.shape == (batch, hidden_sz)
    assert bool(jnp.all(jnp.isfinite(h_m_new))) and bool(jnp.all(jnp.isfinite(h_s_new)))
    print("KERNEL_OK")
</pallas_src>

<mosaic_0001>
module attributes {stable_mosaic.version = 11 : i64} {
  func.func @nprn_kernel(%arg0: i32, %arg1: memref<8x64xf32, #tpu.memory_space<vmem>>, %arg2: memref<8x128xf32, #tpu.memory_space<vmem>>, %arg3: memref<64x128xf32, #tpu.memory_space<vmem>>, %arg4: memref<1x128xf32, #tpu.memory_space<vmem>>, %arg5: memref<128x128xf32, #tpu.memory_space<vmem>>, %arg6: memref<1x128xf32, #tpu.memory_space<vmem>>, %arg7: memref<8x64xf32, #tpu.memory_space<vmem>>) attributes {dimension_semantics = [#tpu.dimension_semantics<parallel>], iteration_bounds = array<i64: 1>, scalar_prefetch = 0 : i64, scratch_operands = 0 : i64, tpu.core_type = #tpu.core_type<tc>, window_params = [{transform_indices = @transform_0, window_bounds = array<i64: 8, 64>}, {transform_indices = @transform_1, window_bounds = array<i64: 8, 128>}, {pipeline_mode = #tpu.pipeline_mode<synchronous>, transform_indices = @transform_2, window_bounds = array<i64: 64, 128>}, {pipeline_mode = #tpu.pipeline_mode<synchronous>, transform_indices = @transform_3, window_bounds = array<i64: 1, 128>}, {pipeline_mode = #tpu.pipeline_mode<synchronous>, transform_indices = @transform_4, window_bounds = array<i64: 128, 128>}, {pipeline_mode = #tpu.pipeline_mode<synchronous>, transform_indices = @transform_5, window_bounds = array<i64: 1, 128>}, {transform_indices = @transform_6, window_bounds = array<i64: 8, 64>}]} {
    %c0 = arith.constant 0 : index
    %c0_0 = arith.constant 0 : index
    %0 = vector.load %arg4[%c0, %c0_0] : memref<1x128xf32, #tpu.memory_space<vmem>>, vector<1x128xf32>
    %c0_1 = arith.constant 0 : index
    %c0_2 = arith.constant 0 : index
    %1 = vector.load %arg1[%c0_1, %c0_2] : memref<8x64xf32, #tpu.memory_space<vmem>>, vector<8x64xf32>
    %c0_3 = arith.constant 0 : index
    %c0_4 = arith.constant 0 : index
    %2 = vector.load %arg3[%c0_3, %c0_4] : memref<64x128xf32, #tpu.memory_space<vmem>>, vector<64x128xf32>
    %cst = arith.constant dense<0.000000e+00> : vector<8x128xf32>
    %3 = tpu.matmul %1, %2, %cst {dimension_numbers = #tpu.dot_dimension_numbers<[1], [0], [0], [1], [0, 0, 1, 1], [], []>} : vector<8x64xf32>, vector<64x128xf32>, vector<8x128xf32> -> vector<8x128xf32>
    %4 = vector.broadcast %0 : vector<1x128xf32> to vector<8x128xf32>
    %5 = arith.addf %4, %3 : vector<8x128xf32>
    %c0_5 = arith.constant 0 : index
    %c0_6 = arith.constant 0 : index
    %6 = vector.load %arg6[%c0_5, %c0_6] : memref<1x128xf32, #tpu.memory_space<vmem>>, vector<1x128xf32>
    %c0_7 = arith.constant 0 : index
    %c0_8 = arith.constant 0 : index
    %7 = vector.load %arg2[%c0_7, %c0_8] : memref<8x128xf32, #tpu.memory_space<vmem>>, vector<8x128xf32>
    %c0_9 = arith.constant 0 : index
    %c0_10 = arith.constant 0 : index
    %8 = vector.load %arg5[%c0_9, %c0_10] : memref<128x128xf32, #tpu.memory_space<vmem>>, vector<128x128xf32>
    %cst_11 = arith.constant dense<0.000000e+00> : vector<8x128xf32>
    %9 = tpu.matmul %7, %8, %cst_11 {dimension_numbers = #tpu.dot_dimension_numbers<[1], [0], [0], [1], [0, 0, 1, 1], [], []>} : vector<8x128xf32>, vector<128x128xf32>, vector<8x128xf32> -> vector<8x128xf32>
    %10 = vector.broadcast %6 : vector<1x128xf32> to vector<8x128xf32>
    %11 = arith.addf %10, %9 : vector<8x128xf32>
    %12 = vector.extract_strided_slice %5 {offsets = [0, 0], sizes = [8, 32], strides = [1, 1]} : vector<8x128xf32> to vector<8x32xf32>
    %13 = vector.extract_strided_slice %5 {offsets = [0, 32], sizes = [8, 32], strides = [1, 1]} : vector<8x128xf32> to vector<8x32xf32>
    %14 = vector.extract_strided_slice %5 {offsets = [0, 64], sizes = [8, 32], strides = [1, 1]} : vector<8x128xf32> to vector<8x32xf32>
    %15 = vector.extract_strided_slice %5 {offsets = [0, 96], sizes = [8, 32], strides = [1, 1]} : vector<8x128xf32> to vector<8x32xf32>
    %16 = vector.extract_strided_slice %11 {offsets = [0, 0], sizes = [8, 32], strides = [1, 1]} : vector<8x128xf32> to vector<8x32xf32>
    %17 = vector.extract_strided_slice %11 {offsets = [0, 32], sizes = [8, 32], strides = [1, 1]} : vector<8x128xf32> to vector<8x32xf32>
    %18 = vector.extract_strided_slice %11 {offsets = [0, 64], sizes = [8, 32], strides = [1, 1]} : vector<8x128xf32> to vector<8x32xf32>
    %19 = vector.extract_strided_slice %11 {offsets = [0, 96], sizes = [8, 32], strides = [1, 1]} : vector<8x128xf32> to vector<8x32xf32>
    %c0_12 = arith.constant 0 : index
    %c32 = arith.constant 32 : index
    %20 = vector.load %arg1[%c0_12, %c32] : memref<8x64xf32, #tpu.memory_space<vmem>>, vector<8x32xf32>
    %c0_13 = arith.constant 0 : index
    %c32_14 = arith.constant 32 : index
    %21 = vector.load %arg2[%c0_13, %c32_14] : memref<8x128xf32, #tpu.memory_space<vmem>>, vector<8x32xf32>
    %cst_15 = arith.constant 0.392699093 : f32
    %22 = vector.broadcast %cst_15 : f32 to vector<8x32xf32>
    %23 = arith.mulf %22, %16 : vector<8x32xf32>
    %cst_16 = arith.constant 1.000000e+00 : f32
    %24 = vector.broadcast %cst_16 : f32 to vector<8x32xf32>
    %25 = arith.addf %24, %23 : vector<8x32xf32>
    %26 = math.rsqrt %25 : vector<8x32xf32>
    %27 = arith.mulf %12, %26 : vector<8x32xf32>
    %28 = arith.negf %27 : vector<8x32xf32>
    %29 = math.exp %28 : vector<8x32xf32>
    %cst_17 = arith.constant 1.000000e+00 : f32
    %30 = vector.broadcast %cst_17 : f32 to vector<8x32xf32>
    %31 = arith.addf %30, %29 : vector<8x32xf32>
    %32 = arith.divf %30, %31 : vector<8x32xf32>
    %cst_18 = arith.constant -0.881373584 : f32
    %33 = vector.broadcast %cst_18 : f32 to vector<8x32xf32>
    %34 = arith.addf %12, %33 : vector<8x32xf32>
    %cst_19 = arith.constant 1.17157292 : f32
    %35 = vector.broadcast %cst_19 : f32 to vector<8x32xf32>
    %36 = arith.mulf %35, %34 : vector<8x32xf32>
    %cst_20 = arith.constant 0.539012074 : f32
    %37 = vector.broadcast %cst_20 : f32 to vector<8x32xf32>
    %38 = arith.mulf %37, %16 : vector<8x32xf32>
    %cst_21 = arith.constant 1.000000e+00 : f32
    %39 = vector.broadcast %cst_21 : f32 to vector<8x32xf32>
    %40 = arith.addf %39, %38 : vector<8x32xf32>
    %41 = math.rsqrt %40 : vector<8x32xf32>
    %42 = arith.mulf %36, %41 : vector<8x32xf32>
    %43 = arith.negf %42 : vector<8x32xf32>
    %44 = math.exp %43 : vector<8x32xf32>
    %cst_22 = arith.constant 1.000000e+00 : f32
    %45 = vector.broadcast %cst_22 : f32 to vector<8x32xf32>
    %46 = arith.addf %45, %44 : vector<8x32xf32>
    %47 = arith.divf %45, %46 : vector<8x32xf32>
    %48 = arith.mulf %32, %32 : vector<8x32xf32>
    %49 = arith.subf %47, %48 : vector<8x32xf32>
    %cst_23 = arith.constant 0.392699093 : f32
    %50 = vector.broadcast %cst_23 : f32 to vector<8x32xf32>
    %51 = arith.mulf %50, %17 : vector<8x32xf32>
    %cst_24 = arith.constant 1.000000e+00 : f32
    %52 = vector.broadcast %cst_24 : f32 to vector<8x32xf32>
    %53 = arith.addf %52, %51 : vector<8x32xf32>
    %54 = math.rsqrt %53 : vector<8x32xf32>
    %55 = arith.mulf %13, %54 : vector<8x32xf32>
    %56 = arith.negf %55 : vector<8x32xf32>
    %57 = math.exp %56 : vector<8x32xf32>
    %cst_25 = arith.constant 1.000000e+00 : f32
    %58 = vector.broadcast %cst_25 : f32 to vector<8x32xf32>
    %59 = arith.addf %58, %57 : vector<8x32xf32>
    %60 = arith.divf %58, %59 : vector<8x32xf32>
    %cst_26 = arith.constant -0.881373584 : f32
    %61 = vector.broadcast %cst_26 : f32 to vector<8x32xf32>
    %62 = arith.addf %13, %61 : vector<8x32xf32>
    %cst_27 = arith.constant 1.17157292 : f32
    %63 = vector.broadcast %cst_27 : f32 to vector<8x32xf32>
    %64 = arith.mulf %63, %62 : vector<8x32xf32>
    %cst_28 = arith.constant 0.539012074 : f32
    %65 = vector.broadcast %cst_28 : f32 to vector<8x32xf32>
    %66 = arith.mulf %65, %17 : vector<8x32xf32>
    %cst_29 = arith.constant 1.000000e+00 : f32
    %67 = vector.broadcast %cst_29 : f32 to vector<8x32xf32>
    %68 = arith.addf %67, %66 : vector<8x32xf32>
    %69 = math.rsqrt %68 : vector<8x32xf32>
    %70 = arith.mulf %64, %69 : vector<8x32xf32>
    %71 = arith.negf %70 : vector<8x32xf32>
    %72 = math.exp %71 : vector<8x32xf32>
    %cst_30 = arith.constant 1.000000e+00 : f32
    %73 = vector.broadcast %cst_30 : f32 to vector<8x32xf32>
    %74 = arith.addf %73, %72 : vector<8x32xf32>
    %75 = arith.divf %73, %74 : vector<8x32xf32>
    %76 = arith.mulf %60, %60 : vector<8x32xf32>
    %77 = arith.subf %75, %76 : vector<8x32xf32>
    %78 = arith.mulf %77, %15 : vector<8x32xf32>
    %79 = arith.mulf %19, %60 : vector<8x32xf32>
    %80 = arith.addf %78, %79 : vector<8x32xf32>
    %81 = arith.addf %60, %77 : vector<8x32xf32>
    %82 = tpu.reciprocal %81 {approx = true} : vector<8x32xf32> -> vector<8x32xf32>
    %83 = arith.mulf %80, %82 : vector<8x32xf32>
    %84 = arith.mulf %77, %19 : vector<8x32xf32>
    %85 = arith.addf %77, %19 : vector<8x32xf32>
    %86 = tpu.reciprocal %85 {approx = true} : vector<8x32xf32> -> vector<8x32xf32>
    %87 = arith.mulf %84, %86 : vector<8x32xf32>
    %88 = arith.addf %14, %83 : vector<8x32xf32>
    %89 = arith.addf %18, %87 : vector<8x32xf32>
    %cst_31 = arith.constant 2.000000e+00 : f32
    %90 = vector.broadcast %cst_31 : f32 to vector<8x32xf32>
    %91 = arith.mulf %90, %88 : vector<8x32xf32>
    %cst_32 = arith.constant 4.000000e+00 : f32
    %92 = vector.broadcast %cst_32 : f32 to vector<8x32xf32>
    %93 = arith.mulf %92, %89 : vector<8x32xf32>
    %cst_33 = arith.constant 0.392699093 : f32
    %94 = vector.broadcast %cst_33 : f32 to vector<8x32xf32>
    %95 = arith.mulf %94, %93 : vector<8x32xf32>
    %cst_34 = arith.constant 1.000000e+00 : f32
    %96 = vector.broadcast %cst_34 : f32 to vector<8x32xf32>
    %97 = arith.addf %96, %95 : vector<8x32xf32>
    %98 = math.rsqrt %97 : vector<8x32xf32>
    %99 = arith.mulf %91, %98 : vector<8x32xf32>
    %100 = arith.negf %99 : vector<8x32xf32>
    %101 = math.exp %100 : vector<8x32xf32>
    %cst_35 = arith.constant 1.000000e+00 : f32
    %102 = vector.broadcast %cst_35 : f32 to vector<8x32xf32>
    %103 = arith.addf %102, %101 : vector<8x32xf32>
    %104 = arith.divf %102, %103 : vector<8x32xf32>
    %cst_36 = arith.constant -0.881373584 : f32
    %105 = vector.broadcast %cst_36 : f32 to vector<8x32xf32>
    %106 = arith.addf %91, %105 : vector<8x32xf32>
    %cst_37 = arith.constant 1.17157292 : f32
    %107 = vector.broadcast %cst_37 : f32 to vector<8x32xf32>
    %108 = arith.mulf %107, %106 : vector<8x32xf32>
    %cst_38 = arith.constant 0.539012074 : f32
    %109 = vector.broadcast %cst_38 : f32 to vector<8x32xf32>
    %110 = arith.mulf %109, %93 : vector<8x32xf32>
    %cst_39 = arith.constant 1.000000e+00 : f32
    %111 = vector.broadcast %cst_39 : f32 to vector<8x32xf32>
    %112 = arith.addf %111, %110 : vector<8x32xf32>
    %113 = math.rsqrt %112 : vector<8x32xf32>
    %114 = arith.mulf %108, %113 : vector<8x32xf32>
    %115 = arith.negf %114 : vector<8x32xf32>
    %116 = math.exp %115 : vector<8x32xf32>
    %cst_40 = arith.constant 1.000000e+00 : f32
    %117 = vector.broadcast %cst_40 : f32 to vector<8x32xf32>
    %118 = arith.addf %117, %116 : vector<8x32xf32>
    %119 = arith.divf %117, %118 : vector<8x32xf32>
    %120 = arith.mulf %104, %104 : vector<8x32xf32>
    %121 = arith.subf %119, %120 : vector<8x32xf32>
    %cst_41 = arith.constant 2.000000e+00 : f32
    %122 = vector.broadcast %cst_41 : f32 to vector<8x32xf32>
    %123 = arith.mulf %122, %104 : vector<8x32xf32>
    %cst_42 = arith.constant 1.000000e+00 : f32
    %124 = vector.broadcast %cst_42 : f32 to vector<8x32xf32>
    %125 = arith.subf %123, %124 : vector<8x32xf32>
    %cst_43 = arith.constant 4.000000e+00 : f32
    %126 = vector.broadcast %cst_43 : f32 to vector<8x32xf32>
    %127 = arith.mulf %126, %121 : vector<8x32xf32>
    %128 = arith.mulf %49, %125 : vector<8x32xf32>
    %129 = arith.mulf %127, %32 : vector<8x32xf32>
    %130 = arith.addf %128, %129 : vector<8x32xf32>
    %131 = arith.addf %32, %49 : vector<8x32xf32>
    %132 = tpu.reciprocal %131 {approx = true} : vector<8x32xf32> -> vector<8x32xf32>
    %133 = arith.mulf %130, %132 : vector<8x32xf32>
    %134 = arith.mulf %49, %127 : vector<8x32xf32>
    %135 = arith.addf %49, %127 : vector<8x32xf32>
    %136 = tpu.reciprocal %135 {approx = true} : vector<8x32xf32> -> vector<8x32xf32>
    %137 = arith.mulf %134, %136 : vector<8x32xf32>
    %cst_44 = arith.constant 1.000000e+00 : f32
    %138 = vector.broadcast %cst_44 : f32 to vector<8x32xf32>
    %139 = arith.subf %138, %32 : vector<8x32xf32>
    %140 = arith.mulf %49, %20 : vector<8x32xf32>
    %141 = arith.mulf %21, %139 : vector<8x32xf32>
    %142 = arith.addf %140, %141 : vector<8x32xf32>
    %143 = arith.addf %139, %49 : vector<8x32xf32>
    %144 = tpu.reciprocal %143 {approx = true} : vector<8x32xf32> -> vector<8x32xf32>
    %145 = arith.mulf %142, %144 : vector<8x32xf32>
    %146 = arith.mulf %49, %21 : vector<8x32xf32>
    %147 = arith.addf %49, %21 : vector<8x32xf32>
    %148 = tpu.reciprocal %147 {approx = true} : vector<8x32xf32> -> vector<8x32xf32>
    %149 = arith.mulf %146, %148 : vector<8x32xf32>
    %150 = arith.addf %133, %145 : vector<8x32xf32>
    %151 = arith.addf %137, %149 : vector<8x32xf32>
    %152 = tpu.concatenate %150, %151 in 1 : vector<8x32xf32>, vector<8x32xf32> -> vector<8x64xf32>
    %c0_45 = arith.constant 0 : index
    %c0_46 = arith.constant 0 : index
    %153 = vector.load %arg7[%c0_45, %c0_46] : memref<8x64xf32, #tpu.memory_space<vmem>>, vector<8x64xf32>
    tpu.vector_store %arg7[%c0_45, %c0_46], %152 {strides = array<i32>} : memref<8x64xf32, #tpu.memory_space<vmem>>, vector<8x64xf32>,
    return
  }
  func.func @transform_0(%arg0: i32) -> (i32, i32) {
    %c0_i32 = arith.constant 0 : i32
    %c0_i32_0 = arith.constant 0 : i32
    return %arg0, %c0_i32 : i32, i32
  }
  func.func @transform_1(%arg0: i32) -> (i32, i32) {
    %c0_i32 = arith.constant 0 : i32
    %c0_i32_0 = arith.constant 0 : i32
    return %arg0, %c0_i32 : i32, i32
  }
  func.func @transform_2(%arg0: i32) -> (i32, i32) {
    %c0_i32 = arith.constant 0 : i32
    %c0_i32_0 = arith.constant 0 : i32
    %c0_i32_1 = arith.constant 0 : i32
    return %c0_i32, %c0_i32_0 : i32, i32
  }
  func.func @transform_3(%arg0: i32) -> (i32, i32) {
    %c0_i32 = arith.constant 0 : i32
    %c0_i32_0 = arith.constant 0 : i32
    %c0_i32_1 = arith.constant 0 : i32
    return %c0_i32, %c0_i32_0 : i32, i32
  }
  func.func @transform_4(%arg0: i32) -> (i32, i32) {
    %c0_i32 = arith.constant 0 : i32
    %c0_i32_0 = arith.constant 0 : i32
    %c0_i32_1 = arith.constant 0 : i32
    return %c0_i32, %c0_i32_0 : i32, i32
  }
  func.func @transform_5(%arg0: i32) -> (i32, i32) {
    %c0_i32 = arith.constant 0 : i32
    %c0_i32_0 = arith.constant 0 : i32
    %c0_i32_1 = arith.constant 0 : i32
    return %c0_i32, %c0_i32_0 : i32, i32
  }
  func.func @transform_6(%arg0: i32) -> (i32, i32) {
    %c0_i32 = arith.constant 0 : i32
    %c0_i32_0 = arith.constant 0 : i32
    return %arg0, %c0_i32 : i32, i32
  }
}

</mosaic_0001>

<llo_original>
// kernel: tpu_custom_call.1
$region0: #{tpu_custom_call.1}
  #allocation0 [shape = 'u32[]', space=smem, size = 0x4, offset = 0x4, fixed_abs, tag = 'smem constant byte address 0x4 - core index']
  #allocation1 [shape = 'u32[144,128]{1,0:T(1,128)}', space=vmem, size = 0x12000, scoped, tag = 'internal scratch']
  %s0 = inlined_call_operand.hbm [shape: f32[8,64], index: 0, kind: input, shape index: {}]
  %s1 = inlined_call_operand.hbm [shape: f32[8,128], index: 1, kind: input, shape index: {}]
  %s2 = inlined_call_operand.hbm [shape: f32[64,128], index: 2, kind: input, shape index: {}]
  %s3 = inlined_call_operand.vmem [shape: f32[1,128], index: 3, kind: input, shape index: {}]
  %s4 = inlined_call_operand.hbm [shape: f32[128,128], index: 4, kind: input, shape index: {}]
  %s5 = inlined_call_operand.vmem [shape: f32[1,128], index: 5, kind: input, shape index: {}]
  %s6 = inlined_call_operand.hbm [shape: f32[8,64], index: 6, kind: output, shape index: {}]
  %s7 = sld [smem:[#allocation0]]
  $region50: #{tpu_custom_call.1} parent=0
    _
  %s9 = ssub.s32 1, %s7
  %s10 = scalar_select 0, %s9, %s7
  $region1: #{tpu_custom_call.1} parent=0
    #allocation2 [shape = 'u8[4096]{0}', space=vmem, size = 0x1000, scoped, tag = 'input window, operand 0, single buffered']
    #allocation3 [shape = 's32[1]{0}', space=sflag, size = 0x4, scoped, tag = 'scoped memory for tpu_custom_call.1']
    #allocation4 [shape = 's32[1]{0}', space=sflag, size = 0x4, scoped, tag = 'scoped memory for tpu_custom_call.1']
    #allocation5 [shape = 'u8[4096]{0}', space=vmem, size = 0x1000, scoped, tag = 'input window, operand 1, single buffered']
    #allocation6 [shape = 's32[1]{0}', space=sflag, size = 0x4, scoped, tag = 'scoped memory for tpu_custom_call.1']
    #allocation7 [shape = 'u8[32768]{0}', space=vmem, size = 0x8000, scoped, tag = 'input window, operand 2, single buffered']
    #allocation8 [shape = 'u8[65536]{0}', space=vmem, size = 0x10000, scoped, tag = 'input window, operand 4, single buffered']
    #allocation9 [shape = 's32[1]{0}', space=sflag, size = 0x4, scoped, tag = 'scoped memory for tpu_custom_call.1']
    #allocation10 [shape = 'u8[4096]{0}', space=vmem, size = 0x1000, scoped, tag = 'output window, operand 0, single buffered']
    %11 = vsyncpa [#allocation3], 0
    %12 = vsyncpa [#allocation6], 0
    %13 = vsyncpa [#allocation9], 0
    %14 = vsyncpa [#allocation4], 0
    // Predicated region
    $region2: #{tpu_custom_call.1} parent=1 // pred_check
      _
    $region3: #{tpu_custom_call.1} parent=1 // pred_check_branch
      %16 = sbr.rel (0) target = $region5
    $region4: #{tpu_custom_call.1} parent=1 // pred_region
      %s18 = ssub.s32 128, 128
      %19 = vsyncadd [#allocation3], %s18
      %s21 = sshll.u32 [#allocation2], 4
      %s22 = int_to_ptr.vmem [resolvable:$true] %s21
      %24 = dma.hbm_to_vmem [thread:$0]  %s0, 128, %s22, [#allocation3]
    $region5: #{tpu_custom_call.1} parent=1 // pred_fallthru
      _
    // Predicated region
    $region6: #{tpu_custom_call.1} parent=1 // pred_check
      _
    $region7: #{tpu_custom_call.1} parent=1 // pred_check_branch
      %26 = sbr.rel (0) target = $region9
    $region8: #{tpu_custom_call.1} parent=1 // pred_region
      %s28 = ssub.s32 128, 128
      %29 = vsyncadd [#allocation6], %s28
      %s31 = sshll.u32 [#allocation5], 4
      %s32 = int_to_ptr.vmem [resolvable:$true] %s31
      %34 = dma.hbm_to_vmem [thread:$0]  %s1, 128, %s32, [#allocation6]
    $region9: #{tpu_custom_call.1} parent=1 // pred_fallthru
      _
    // Predicated region
    $region10: #{tpu_custom_call.1} parent=1 // pred_check
      _
    $region11: #{tpu_custom_call.1} parent=1 // pred_check_branch
      %36 = sbr.rel (0) target = $region13
    $region12: #{tpu_custom_call.1} parent=1 // pred_region
      %s38 = ssub.s32 1024, 1024
      %39 = vsyncadd [#allocation6], %s38
      %s40 = sshll.u32 [#allocation7], 4
      %s41 = int_to_ptr.vmem [resolvable:$true] %s40
      %46 = dma.hbm_to_vmem [thread:$0]  %s2, 1024, %s41, [#allocation6], 128, 128, 8
    $region13: #{tpu_custom_call.1} parent=1 // pred_fallthru
      _
    // Predicated region
    $region14: #{tpu_custom_call.1} parent=1 // pred_check
      _
    $region15: #{tpu_custom_call.1} parent=1 // pred_check_branch
      %48 = sbr.rel (0) target = $region17
    $region16: #{tpu_custom_call.1} parent=1 // pred_region
      _
    $region17: #{tpu_custom_call.1} parent=1 // pred_fallthru
      _
    // Predicated region
    $region18: #{tpu_custom_call.1} parent=1 // pred_check
      _
    $region19: #{tpu_custom_call.1} parent=1 // pred_check_branch
      %50 = sbr.rel (0) target = $region21
    $region20: #{tpu_custom_call.1} parent=1 // pred_region
      %s52 = ssub.s32 2048, 2048
      %53 = vsyncadd [#allocation9], %s52
      %s54 = sshll.u32 [#allocation8], 4
      %s55 = int_to_ptr.vmem [resolvable:$true] %s54
      %60 = dma.hbm_to_vmem [thread:$0]  %s4, 2048, %s55, [#allocation9], 128, 128, 8
    $region21: #{tpu_custom_call.1} parent=1 // pred_fallthru
      _
    // Predicated region
    $region22: #{tpu_custom_call.1} parent=1 // pred_check
      _
    $region23: #{tpu_custom_call.1} parent=1 // pred_check_branch
      %62 = sbr.rel (0) target = $region25
    $region24: #{tpu_custom_call.1} parent=1 // pred_region
      _
    $region25: #{tpu_custom_call.1} parent=1 // pred_fallthru
      _
    // Predicated region
    $region26: #{tpu_custom_call.1} parent=1 // pred_check
      _
    $region27: #{tpu_custom_call.1} parent=1 // pred_check_branch
      %64 = sbr.rel (0) target = $region29
    $region28: #{tpu_custom_call.1} parent=1 // pred_region
      %65 = dma.done [#allocation3], 128
    $region29: #{tpu_custom_call.1} parent=1 // pred_fallthru
      _
    // Predicated region
    $region30: #{tpu_custom_call.1} parent=1 // pred_check
      _
    $region31: #{tpu_custom_call.1} parent=1 // pred_check_branch
      %67 = sbr.rel (0) target = $region33
    $region32: #{tpu_custom_call.1} parent=1 // pred_region
      %68 = dma.done [#allocation6], 128
    $region33: #{tpu_custom_call.1} parent=1 // pred_fallthru
      _
    // Predicated region
    $region34: #{tpu_custom_call.1} parent=1 // pred_check
      _
    $region35: #{tpu_custom_call.1} parent=1 // pred_check_branch
      %70 = sbr.rel (0) target = $region37
    $region36: #{tpu_custom_call.1} parent=1 // pred_region
      %71 = dma.done [#allocation6], 1024
    $region37: #{tpu_custom_call.1} parent=1 // pred_fallthru
      _
    // Predicated region
    $region38: #{tpu_custom_call.1} parent=1 // pred_check
      _
    $region39: #{tpu_custom_call.1} parent=1 // pred_check_branch
      %73 = sbr.rel (0) target = $region41
    $region40: #{tpu_custom_call.1} parent=1 // pred_region
      %74 = dma.done [#allocation9], 2048
    $region41: #{tpu_custom_call.1} parent=1 // pred_fallthru
      _
    %v75 = vld [vmem:[%s3] sm:$0x1]
    %v76 = vld [vmem:[#allocation2] sm:$0xff]
    %v77 = vld [vmem:[#allocation7] sm:$0xff]
    %v78 = vld [vmem:[#allocation7 + $0x8] sm:$0xff]
    %v79 = vld [vmem:[#allocation7 + $0x10] sm:$0xff]
    %v80 = vld [vmem:[#allocation7 + $0x18] sm:$0xff]
    %v81 = vld [vmem:[#allocation7 + $0x20] sm:$0xff]
    %v82 = vld [vmem:[#allocation7 + $0x28] sm:$0xff]
    %v83 = vld [vmem:[#allocation7 + $0x30] sm:$0xff]
    %v84 = vld [vmem:[#allocation7 + $0x38] sm:$0xff]
    %vm85 = vcmask 523264
    %v87 = vsel %vm85, %v76, 0
    %89 = vmatprep.subr.mxu0 0.0
    %90 = vmatpush1.msra.mxu0 0.0
    %91 = vmatprep.subr.mxu0 0.0
    %92 = vmatpush1.msra.mxu0 0.0
    %93 = vmatprep.subr.mxu0 0.0
    %94 = vmatpush1.msra.mxu0 0.0
    %95 = vmatprep.subr.mxu0 0.0
    %96 = vmatpush1.msra.mxu0 0.0
    %97 = vmatprep.subr.mxu0 0.0
    %98 = vmatpush1.msra.mxu0 0.0
    %99 = vmatprep.subr.mxu0 0.0
    %100 = vmatpush1.msra.mxu0 0.0
    %101 = vmatprep.subr.mxu0 0.0
    %102 = vmatpush1.msra.mxu0 0.0
    %103 = vmatprep.subr.mxu0 0.0
    %104 = vmatpush1.msra.mxu0 0.0
    %105 = vmatprep.subr.mxu0 0.0
    %106 = vmatpush1.msra.mxu0 %v84
    %107 = vmatprep.subr.mxu0 0.0
    %108 = vmatpush1.msra.mxu0 %v83
    %109 = vmatprep.subr.mxu0 0.0
    %110 = vmatpush1.msra.mxu0 %v82
    %111 = vmatprep.subr.mxu0 0.0
    %112 = vmatpush1.msra.mxu0 %v81
    %113 = vmatprep.subr.mxu0 0.0
    %114 = vmatpush1.msra.mxu0 %v80
    %115 = vmatprep.subr.mxu0 0.0
    %116 = vmatpush1.msra.mxu0 %v79
    %117 = vmatprep.subr.mxu0 0.0
    %118 = vmatpush1.msra.mxu0 %v78
    %119 = vmatprep.subr.mxu0 0.0
    %120 = vmatpush1.msra.mxu0 %v77
    %121 = vmatprep.subr.mxu0 0.0
    %122 = vmatpush2.msra.mxu0 0.0
    %123 = vmatprep.subr.mxu0 0.0
    %124 = vmatpush2.msra.mxu0 0.0
    %125 = vmatprep.subr.mxu0 0.0
    %126 = vmatpush2.msra.mxu0 0.0
    %127 = vmatprep.subr.mxu0 0.0
    %128 = vmatpush2.msra.mxu0 0.0
    %129 = vmatprep.subr.mxu0 0.0
    %130 = vmatpush2.msra.mxu0 0.0
    %131 = vmatprep.subr.mxu0 0.0
    %132 = vmatpush2.msra.mxu0 0.0
    %133 = vmatprep.subr.mxu0 0.0
    %134 = vmatpush2.msra.mxu0 0.0
    %135 = vmatprep.subr.mxu0 0.0
    %136 = vmatpush2.msra.mxu0 0.0
    %137 = vmatprep.subr.mxu0 0.0
    %138 = vmatpush2.msra.mxu0 0.0
    %139 = vmatprep.subr.mxu0 0.0
    %140 = vmatpush2.msra.mxu0 0.0
    %141 = vmatprep.subr.mxu0 0.0
    %142 = vmatpush2.msra.mxu0 0.0
    %143 = vmatprep.subr.mxu0 0.0
    %144 = vmatpush2.msra.mxu0 0.0
    %145 = vmatprep.subr.mxu0 0.0
    %146 = vmatpush2.msra.mxu0 0.0
    %147 = vmatprep.subr.mxu0 0.0
    %148 = vmatpush2.msra.mxu0 0.0
    %149 = vmatprep.subr.mxu0 0.0
    %150 = vmatpush2.msra.mxu0 0.0
    %151 = vmatprep.subr.mxu0 0.0
    %152 = vmatpush2.msra.mxu0 0.0
    %153 = vmatprep.mubr.f32.mxu0 0.0
    %154 = vmatmul.mubr.f32.gmra.mxu0 %v87
    %v155 = vpop.f32.mrf.mxu0
    %v156 = vadd.f32 0.0, %v155
    %v157 = vpop.f32.mrf.mxu0
    %158 = vdwg.mxu0
    %v160 = vlaneseq
    %v161 = vshrl.u32 %v160, 7
    %v162 = vsub.s32 0, %v161
    %v163 = vrot.slane %v75, %v162
    %v165 = vadd.f32 %v163, %v156
    %v166 = vld [vmem:[%s5] sm:$0x1]
    %v167 = vld [vmem:[#allocation5] sm:$0xff]
    %v168 = vld [vmem:[#allocation8] sm:$0xff]
    %v169 = vld [vmem:[#allocation8 + $0x8] sm:$0xff]
    %v170 = vld [vmem:[#allocation8 + $0x10] sm:$0xff]
    %v171 = vld [vmem:[#allocation8 + $0x18] sm:$0xff]
    %v172 = vld [vmem:[#allocation8 + $0x20] sm:$0xff]
    %v173 = vld [vmem:[#allocation8 + $0x28] sm:$0xff]
    %v174 = vld [vmem:[#allocation8 + $0x30] sm:$0xff]
    %v175 = vld [vmem:[#allocation8 + $0x38] sm:$0xff]
    %v176 = vld [vmem:[#allocation8 + $0x40] sm:$0xff]
    %v177 = vld [vmem:[#allocation8 + $0x48] sm:$0xff]
    %v178 = vld [vmem:[#allocation8 + $0x50] sm:$0xff]
    %v179 = vld [vmem:[#allocation8 + $0x58] sm:$0xff]
    %v180 = vld [vmem:[#allocation8 + $0x60] sm:$0xff]
    %v181 = vld [vmem:[#allocation8 + $0x68] sm:$0xff]
    %v182 = vld [vmem:[#allocation8 + $0x70] sm:$0xff]
    %v183 = vld [vmem:[#allocation8 + $0x78] sm:$0xff]
    %184 = vmatprep.subr.mxu0 0.0
    %185 = vmatpush1.msra.mxu0 %v183
    %186 = vmatprep.subr.mxu0 0.0
    %187 = vmatpush1.msra.mxu0 %v182
    %188 = vmatprep.subr.mxu0 0.0
    %189 = vmatpush1.msra.mxu0 %v181
    %190 = vmatprep.subr.mxu0 0.0
    %191 = vmatpush1.msra.mxu0 %v180
    %192 = vmatprep.subr.mxu0 0.0
    %193 = vmatpush1.msra.mxu0 %v179
    %194 = vmatprep.subr.mxu0 0.0
    %195 = vmatpush1.msra.mxu0 %v178
    %196 = vmatprep.subr.mxu0 0.0
    %197 = vmatpush1.msra.mxu0 %v177
    %198 = vmatprep.subr.mxu0 0.0
    %199 = vmatpush1.msra.mxu0 %v176
    %200 = vmatprep.subr.mxu0 0.0
    %201 = vmatpush1.msra.mxu0 %v175
    %202 = vmatprep.subr.mxu0 0.0
    %203 = vmatpush1.msra.mxu0 %v174
    %204 = vmatprep.subr.mxu0 0.0
    %205 = vmatpush1.msra.mxu0 %v173
    %206 = vmatprep.subr.mxu0 0.0
    %207 = vmatpush1.msra.mxu0 %v172
    %208 = vmatprep.subr.mxu0 0.0
    %209 = vmatpush1.msra.mxu0 %v171
    %210 = vmatprep.subr.mxu0 0.0
    %211 = vmatpush1.msra.mxu0 %v170
    %212 = vmatprep.subr.mxu0 0.0
    %213 = vmatpush1.msra.mxu0 %v169
    %214 = vmatprep.subr.mxu0 0.0
    %215 = vmatpush1.msra.mxu0 %v168
    %216 = vmatprep.subr.mxu0 0.0
    %217 = vmatpush2.msra.mxu0 0.0
    %218 = vmatprep.subr.mxu0 0.0
    %219 = vmatpush2.msra.mxu0 0.0
    %220 = vmatprep.subr.mxu0 0.0
    %221 = vmatpush2.msra.mxu0 0.0
    %222 = vmatprep.subr.mxu0 0.0
    %223 = vmatpush2.msra.mxu0 0.0
    %224 = vmatprep.subr.mxu0 0.0
    %225 = vmatpush2.msra.mxu0 0.0
    %226 = vmatprep.subr.mxu0 0.0
    %227 = vmatpush2.msra.mxu0 0.0
    %228 = vmatprep.subr.mxu0 0.0
    %229 = vmatpush2.msra.mxu0 0.0
    %230 = vmatprep.subr.mxu0 0.0
    %231 = vmatpush2.msra.mxu0 0.0
    %232 = vmatprep.subr.mxu0 0.0
    %233 = vmatpush2.msra.mxu0 0.0
    %234 = vmatprep.subr.mxu0 0.0
    %235 = vmatpush2.msra.mxu0 0.0
    %236 = vmatprep.subr.mxu0 0.0
    %237 = vmatpush2.msra.mxu0 0.0
    %238 = vmatprep.subr.mxu0 0.0
    %239 = vmatpush2.msra.mxu0 0.0
    %240 = vmatprep.subr.mxu0 0.0
    %241 = vmatpush2.msra.mxu0 0.0
    %242 = vmatprep.subr.mxu0 0.0
    %243 = vmatpush2.msra.mxu0 0.0
    %244 = vmatprep.subr.mxu0 0.0
    %245 = vmatpush2.msra.mxu0 0.0
    %246 = vmatprep.subr.mxu0 0.0
    %247 = vmatpush2.msra.mxu0 0.0
    %248 = vmatprep.mubr.f32.mxu0 0.0
    %249 = vmatmul.mubr.f32.gmra.mxu0 %v167
    %v250 = vpop.f32.mrf.mxu0
    %v251 = vadd.f32 0.0, %v250
    %v252 = vpop.f32.mrf.mxu0
    %253 = vdwg.mxu0
    %v255 = vlaneseq
    %v256 = vshrl.u32 %v255, 7
    %v257 = vsub.s32 0, %v256
    %v258 = vrot.slane %v166, %v257
    %v260 = vadd.f32 %v258, %v251
    %v261 = vmul.f32 %v260, 0.3926991
    %v262 = vadd.f32 %v261, 1.0
    %v263 = vrsqrt.pop %v262
    %v264 = vmul.f32 %v165, %v263
    %v265 = vxor.u32 %v264, 2147483648
    %v266 = vmul.f32 %v265, 1.442695
    %v267 = vpow.pop %v266
    %v268 = vadd.f32 %v267, 1.0
    %v269 = vrcp.pop %v268
    %v270 = vmul.f32 1.0, %v269
    %v271 = vadd.f32 %v165, -0.8813736
    %v272 = vmul.f32 %v271, 1.1715729
    %v273 = vmul.f32 %v260, 0.5390121
    %v274 = vadd.f32 %v273, 1.0
    %v275 = vrsqrt.pop %v274
    %v276 = vmul.f32 %v272, %v275
    %v277 = vxor.u32 %v276, 2147483648
    %v278 = vmul.f32 %v277, 1.442695
    %v279 = vpow.pop %v278
    %v280 = vadd.f32 %v279, 1.0
    %v281 = vrcp.pop %v280
    %v282 = vmul.f32 1.0, %v281
    %v283 = vmul.f32 %v270, %v270
    %v284 = vsub.f32 %v282, %v283
    %286 = vrot.lane.b32.xlu0 %v165, 64
    %v287 = vpop.permute.xlu0 %286
    %v289 = vmul.f32 %v284, %v287
    %291 = vrot.lane.b32.xlu0 %v270, 64
    %v292 = vpop.permute.xlu0 %291
    %v294 = vmul.f32 %v260, %v292
    %296 = vrot.lane.b32.xlu0 %v294, 64
    %v297 = vpop.permute.xlu0 %296
    %v299 = vadd.f32 %v289, %v297
    %v300 = vadd.f32 %v270, %v284
    %v301 = vrcp.pop %v300
    %v302 = vmul.f32 %v299, %v301
    %304 = vrot.lane.b32.xlu0 %v260, 64
    %v305 = vpop.permute.xlu0 %304
    %v307 = vmul.f32 %v284, %v305
    %v308 = vadd.f32 %v284, %v305
    %v309 = vrcp.pop %v308
    %v310 = vmul.f32 %v307, %v309
    %312 = vrot.lane.b32.xlu0 %v302, 32
    %v313 = vpop.permute.xlu0 %312
    %v315 = vadd.f32 %v165, %v313
    %317 = vrot.lane.b32.xlu0 %v310, 32
    %v318 = vpop.permute.xlu0 %317
    %v320 = vadd.f32 %v260, %v318
    %v321 = vmul.f32 %v315, 2.0
    %v322 = vmul.f32 %v320, 4.0
    %v323 = vmul.f32 %v322, 0.3926991
    %v324 = vadd.f32 %v323, 1.0
    %v325 = vrsqrt.pop %v324
    %v326 = vmul.f32 %v321, %v325
    %v327 = vxor.u32 %v326, 2147483648
    %v328 = vmul.f32 %v327, 1.442695
    %v329 = vpow.pop %v328
    %v330 = vadd.f32 %v329, 1.0
    %v331 = vrcp.pop %v330
    %v332 = vmul.f32 1.0, %v331
    %v333 = vadd.f32 %v321, -0.8813736
    %v334 = vmul.f32 %v333, 1.1715729
    %v335 = vmul.f32 %v322, 0.5390121
    %v336 = vadd.f32 %v335, 1.0
    %v337 = vrsqrt.pop %v336
    %v338 = vmul.f32 %v334, %v337
    %v339 = vxor.u32 %v338, 2147483648
    %v340 = vmul.f32 %v339, 1.442695
    %v341 = vpow.pop %v340
    %v342 = vadd.f32 %v341, 1.0
    %v343 = vrcp.pop %v342
    %v344 = vmul.f32 1.0, %v343
    %v345 = vmul.f32 %v332, %v332
    %v346 = vsub.f32 %v344, %v345
    %v347 = vmul.f32 %v332, 2.0
    %v348 = vsub.f32 %v347, 1.0
    %v349 = vmul.f32 %v346, 4.0
    %351 = vrot.lane.b32.xlu0 %v348, 64
    %v352 = vpop.permute.xlu0 %351
    %v354 = vmul.f32 %v284, %v352
    %v355 = vmul.f32 %v349, %v292
    %357 = vrot.lane.b32.xlu0 %v355, 64
    %v358 = vpop.permute.xlu0 %357
    %v360 = vadd.f32 %v354, %v358
    %v361 = vmul.f32 %v360, %v301
    %363 = vrot.lane.b32.xlu0 %v349, 64
    %v364 = vpop.permute.xlu0 %363
    %v366 = vmul.f32 %v284, %v364
    %v367 = vadd.f32 %v284, %v364
    %v368 = vrcp.pop %v367
    %v369 = vmul.f32 %v366, %v368
    %v370 = vsub.f32 1.0, %v270
    %371 = vrot.lane.b32.xlu0 %v76, 96
    %v372 = vpop.permute.xlu0 %371
    %v374 = vmul.f32 %v284, %v372
    %376 = vrot.lane.b32.xlu0 %v370, 32
    %v377 = vpop.permute.xlu0 %376
    %v379 = vmul.f32 %v167, %v377
    %381 = vrot.lane.b32.xlu0 %v379, 96
    %v382 = vpop.permute.xlu0 %381
    %v384 = vadd.f32 %v374, %v382
    %v385 = vadd.f32 %v370, %v284
    %v386 = vrcp.pop %v385
    %v387 = vmul.f32 %v384, %v386
    %389 = vrot.lane.b32.xlu0 %v167, 96
    %v390 = vpop.permute.xlu0 %389
    %v392 = vmul.f32 %v284, %v390
    %v393 = vadd.f32 %v284, %v390
    %v394 = vrcp.pop %v393
    %v395 = vmul.f32 %v392, %v394
    %v396 = vadd.f32 %v361, %v387
    %v397 = vadd.f32 %v369, %v395
    %399 = vrot.lane.b32.xlu0 %v397, 32
    %v400 = vpop.permute.xlu0 %399
    %vm402 = vcmask 261120
    %v403 = vsel %vm402, %v396, %v400
    %404 = vst.msk [vmem:[#allocation10] sm:$0xff] %vm85, %v403
    // Predicated region
    $region42: #{tpu_custom_call.1} parent=1 // pred_check
      _
    $region43: #{tpu_custom_call.1} parent=1 // pred_check_branch
      %406 = sbr.rel (0) target = $region45
    $region44: #{tpu_custom_call.1} parent=1 // pred_region
      %s408 = ssub.s32 128, 128
      %409 = vsyncadd [#allocation4], %s408
      %s411 = sshll.u32 [#allocation10], 4
      %s412 = int_to_ptr.vmem [resolvable:$true] %s411
      %414 = dma.vmem_to_hbm [thread:$0]  %s412, 128, %s6, [#allocation4]
    $region45: #{tpu_custom_call.1} parent=1 // pred_fallthru
      _
    // Predicated region
    $region46: #{tpu_custom_call.1} parent=1 // pred_check
      _
    $region47: #{tpu_custom_call.1} parent=1 // pred_check_branch
      %416 = sbr.rel (0) target = $region49
    $region48: #{tpu_custom_call.1} parent=1 // pred_region
      %417 = dma.done [#allocation4], 128
    $region49: #{tpu_custom_call.1} parent=1 // pred_fallthru
      _
    %418 = vsyncpa [#allocation3], 1
    %419 = vsyncpa [#allocation6], 1
    %420 = vsyncpa [#allocation9], 1
    %421 = vsyncpa [#allocation4], 1

</llo_original>
